<compile_context>
chip_gen: v7x
topology: tpu7x:2x2x1
jax: 0.10.0
libtpu: 0.0.40
codegen_flags: <defaults>
</compile_context>

<pallas_src>
import numpy as np
import jax
import jax.numpy as jnp
from jax import lax
from jax.experimental import pallas as pl
from jax.experimental.pallas import tpu as pltpu


def _make_kernel(kw, tile, num_f_tiles):
    def kernel(xp_ref, x_ref, w1_ref, w2_ref, b_ref, o_ref):
        """One (batch, F-tile) grid step.

        xp_ref, x_ref : (C_in, F_in_pad)  dilated+padded slabs, resident per batch
        w1_ref, w2_ref: (kW, C_out, C_in) per-tap flipped / io-transposed weights
        b_ref         : (C_out, 1)        bias
        o_ref         : (C_out, TILE)     lane-dense output tile (TILE % 128 == 0)
        """
        if num_f_tiles == 1:
            base = 0                                        # static slices
        else:
            base = pl.multiple_of(pl.program_id(1) * tile, tile)
        acc = jnp.zeros(o_ref.shape, jnp.float32)
        for k in range(kw):                                 # static unroll over taps
            acc += jnp.dot(w1_ref[k], xp_ref[:, pl.ds(base + k, tile)],
                           preferred_element_type=jnp.float32)
            acc += jnp.dot(w2_ref[k], x_ref[:, pl.ds(base + k, tile)],
                           preferred_element_type=jnp.float32)
        o_ref[...] = (acc + b_ref[...]).astype(o_ref.dtype)
    return kernel


def online_causal_trans_conv_block(x, x_prev, kernel1, kernel2, bias, *,
                                   stride=1, padding=0, output_padding=0,
                                   groups=1):
    """Forward of OnlineCausalTransConvBlock (time-kernel size 2).

    x, x_prev : (B, C_in, F)      channel-first, like torch
    kernel1   : (C_in, C_out, kW) conv_transpose weight applied to x_prev
    kernel2   : (C_in, C_out, kW) conv_transpose weight applied to x
    bias      : (C_out,) or None
    Returns (y, new_x_prev) just like the torch module.
    """
    if groups != 1:
        # TODO(synk): grouped transposed conv not implemented.
        raise NotImplementedError("groups > 1 not supported")
    if x_prev is None:
        x_prev = jnp.zeros_like(x)
    if kernel1 is None:                    # kernel_size[0] < 2 branch: conv1_out == 0
        kernel1 = jnp.zeros_like(kernel2)

    B, C_in, F = x.shape
    _, C_out, kW = kernel2.shape
    if bias is None:
        bias = jnp.zeros((C_out,), x.dtype)

    # ---------------- glue: O(input size), no im2col expansion ----------------
    # conv_transpose1d(x, w, s, p, op) == correlation(
    #     pad(dilate_s(x), lo=kW-1-p, hi=kW-1-p+op), flip_k(transpose_io(w)) )
    lo = kW - 1 - padding
    hi = kW - 1 - padding + output_padding
    F_out = (F - 1) * stride - 2 * padding + kW + output_padding

    # Lane tiling of the output frequency axis (multiple of 128 -> dense stores).
    LANE = 128
    f128 = ((F_out + LANE - 1) // LANE) * LANE
    tile = min(512, f128)     # TODO(synk): per-generation tuning (1024 on v6e)
    F_out_pad = ((F_out + tile - 1) // tile) * tile
    num_f_tiles = F_out_pad // tile
    F_in_pad = F_out_pad + kW - 1            # halo so every tap slice is in range

    zero = jnp.zeros((), x.dtype)
    pad_cfg = [(0, 0, 0), (0, 0, 0), (lo, hi, stride - 1)]
    xp_d = lax.pad(x_prev, zero, pad_cfg)    # negative lo/hi legally crop
    x_d = lax.pad(x, zero, pad_cfg)
    # Trailing zero-pad to F_in_pad in a *separate* step so a negative `hi`
    # crop is never merged with zero padding.
    extra = F_in_pad - x_d.shape[-1]
    tail_cfg = [(0, 0, 0), (0, 0, 0), (0, extra, 0)]
    xp_d = lax.pad(xp_d, zero, tail_cfg)
    x_d = lax.pad(x_d, zero, tail_cfg)

    # Per-tap flipped / io-transposed weights: w_taps[k, o, i] = w[i, o, kW-1-k]
    w1_taps = jnp.transpose(kernel1, (2, 1, 0))[::-1]
    w2_taps = jnp.transpose(kernel2, (2, 1, 0))[::-1]
    bias2d = bias.reshape(C_out, 1)

    # Explicit VMEM budget (all buffers assumed double-buffered) + headroom.
    itemsize = x.dtype.itemsize
    buf_bytes = (
        2 * 2 * C_in * F_in_pad          # xp_d, x_d slabs
        + 2 * 2 * kW * C_out * C_in      # w1, w2
        + 2 * C_out                      # bias
        + 2 * C_out * tile               # output tile
    ) * itemsize
    vmem_limit = int(min(64 * 2 ** 20, max(2 * buf_bytes + (4 << 20), 16 << 20)))

    # ---------------------------- Pallas kernel ------------------------------
    y3d = pl.pallas_call(
        _make_kernel(kW, tile, num_f_tiles),
        out_shape=jax.ShapeDtypeStruct((B, C_out, F_out_pad), x.dtype),
        grid=(B, num_f_tiles),
        in_specs=[
            pl.BlockSpec((None, C_in, F_in_pad), lambda b, j: (b, 0, 0)),  # x_prev slab
            pl.BlockSpec((None, C_in, F_in_pad), lambda b, j: (b, 0, 0)),  # x slab
            pl.BlockSpec((kW, C_out, C_in), lambda b, j: (0, 0, 0)),       # w1 taps (resident)
            pl.BlockSpec((kW, C_out, C_in), lambda b, j: (0, 0, 0)),       # w2 taps (resident)
            pl.BlockSpec((C_out, 1), lambda b, j: (0, 0)),                 # bias (resident)
        ],
        out_specs=pl.BlockSpec((None, C_out, tile), lambda b, j: (b, 0, j)),
        compiler_params=pltpu.CompilerParams(
            dimension_semantics=("parallel", "parallel"),
            vmem_limit_bytes=vmem_limit,
        ),
    )(xp_d, x_d, w1_taps, w2_taps, bias2d)

    y = y3d[:, :, :F_out]        # pure slice — no transpose pass
    return y, x


# ------------------------------- reference -----------------------------------
def _conv_transpose1d_ref(x, w, stride, padding, output_padding):
    """Direct scatter implementation of torch.nn.functional.conv_transpose1d."""
    x = np.asarray(x, np.float32)
    w = np.asarray(w, np.float32)
    B, C_in, F = x.shape
    _, C_out, kW = w.shape
    L = (F - 1) * stride + kW + output_padding
    full = np.zeros((B, C_out, L), np.float32)
    for j in range(F):
        for k in range(kW):
            full[:, :, j * stride + k] += x[:, :, j] @ w[:, :, k]
    F_out = (F - 1) * stride - 2 * padding + kW + output_padding
    return full[:, :, padding:padding + F_out]


def _reference(x, x_prev, k1, k2, bias, *, stride, padding, output_padding):
    y = (_conv_transpose1d_ref(x_prev, k1, stride, padding, output_padding)
         + _conv_transpose1d_ref(x, k2, stride, padding, output_padding))
    return y + np.asarray(bias)[None, :, None]


if __name__ == "__main__":
    # Small shapes consistent with the forward: x is [B, C, F].
    B, C_in, C_out, F, KW = 2, 4, 4, 16, 3

    key = jax.random.PRNGKey(0)
    k_x, k_xp, k_w, k_b = jax.random.split(key, 4)

    x = jax.random.normal(k_x, (B, C_in, F), dtype=jnp.float32)
    x_prev = jax.random.normal(k_xp, (B, C_in, F), dtype=jnp.float32)

    # Wrapped ConvTranspose2d weight is [C_in, C_out, 2, KW]; the module slices
    # kernel1 = w[:, :, 1, :] (applied to x_prev) and kernel2 = w[:, :, 0, :].
    conv_weight = jax.random.normal(k_w, (C_in, C_out, 2, KW), dtype=jnp.float32) * 0.1
    kernel1 = conv_weight[:, :, 1, :]
    kernel2 = conv_weight[:, :, 0, :]
    bias = jax.random.normal(k_b, (C_out,), dtype=jnp.float32) * 0.1

    configs = [
        dict(stride=1, padding=1, output_padding=0),   # basic causal case
        dict(stride=2, padding=3, output_padding=1),   # dilation + negative edge crop
    ]
    for cfg in configs:
        y, new_x_prev = online_causal_trans_conv_block(
            x, x_prev, kernel1, kernel2, bias, **cfg)
        jax.block_until_ready((y, new_x_prev))
        F_out = (F - 1) * cfg["stride"] - 2 * cfg["padding"] + KW + cfg["output_padding"]
        y_ref = _reference(x, x_prev, kernel1, kernel2, bias, **cfg)
        assert y.shape == (B, C_out, F_out), (y.shape, cfg)
        assert np.allclose(np.asarray(y), y_ref, atol=1e-5, rtol=1e-5), \
            f"mismatch vs conv_transpose1d reference for {cfg}"
        assert jnp.array_equal(new_x_prev, x), "x_prev state not passed through"

    # x_prev = None branch (first streaming step)
    y0, _ = online_causal_trans_conv_block(
        x, None, kernel1, kernel2, bias, stride=1, padding=1, output_padding=0)
    jax.block_until_ready(y0)
    y0_ref = _reference(x, np.zeros_like(np.asarray(x)), kernel1, kernel2, bias,
                        stride=1, padding=1, output_padding=0)
    assert np.allclose(np.asarray(y0), y0_ref, atol=1e-5, rtol=1e-5), \
        "mismatch for x_prev=None branch"

    print("KERNEL_OK")
</pallas_src>

<mosaic_0001>
module attributes {stable_mosaic.version = 11 : i64} {
  func.func @kernel(%arg0: i32, %arg1: i32, %arg2: memref<1x4x130xf32, #tpu.memory_space<vmem>>, %arg3: memref<1x4x130xf32, #tpu.memory_space<vmem>>, %arg4: memref<3x4x4xf32, #tpu.memory_space<vmem>>, %arg5: memref<3x4x4xf32, #tpu.memory_space<vmem>>, %arg6: memref<4x1xf32, #tpu.memory_space<vmem>>, %arg7: memref<1x4x128xf32, #tpu.memory_space<vmem>>) attributes {dimension_semantics = [#tpu.dimension_semantics<parallel>, #tpu.dimension_semantics<parallel>], iteration_bounds = array<i64: 2, 1>, scalar_prefetch = 0 : i64, scratch_operands = 0 : i64, tpu.core_type = #tpu.core_type<tc>, window_params = [{transform_indices = @transform_0, window_bounds = array<i64: 1, 4, 130>}, {transform_indices = @transform_1, window_bounds = array<i64: 1, 4, 130>}, {pipeline_mode = #tpu.pipeline_mode<synchronous>, transform_indices = @transform_2, window_bounds = array<i64: 3, 4, 4>}, {pipeline_mode = #tpu.pipeline_mode<synchronous>, transform_indices = @transform_3, window_bounds = array<i64: 3, 4, 4>}, {pipeline_mode = #tpu.pipeline_mode<synchronous>, transform_indices = @transform_4, window_bounds = array<i64: 4, 1>}, {transform_indices = @transform_5, window_bounds = array<i64: 1, 4, 128>}]} {
    %cst = arith.constant 0.000000e+00 : f32
    %0 = vector.broadcast %cst : f32 to vector<4x128xf32>
    %c0 = arith.constant 0 : index
    %c0_0 = arith.constant 0 : index
    %c0_1 = arith.constant 0 : index
    %1 = vector.load %arg4[%c0, %c0_0, %c0_1] : memref<3x4x4xf32, #tpu.memory_space<vmem>>, vector<1x4x4xf32>
    %2 = vector.shape_cast %1 : vector<1x4x4xf32> to vector<4x4xf32>
    %c0_2 = arith.constant 0 : index
    %c0_3 = arith.constant 0 : index
    %c0_4 = arith.constant 0 : index
    %3 = vector.load %arg2[%c0_2, %c0_3, %c0_4] : memref<1x4x130xf32, #tpu.memory_space<vmem>>, vector<1x4x128xf32>
    %4 = vector.shape_cast %3 : vector<1x4x128xf32> to vector<4x128xf32>
    %cst_5 = arith.constant dense<0.000000e+00> : vector<4x128xf32>
    %5 = tpu.matmul %2, %4, %cst_5 {dimension_numbers = #tpu.dot_dimension_numbers<[1], [0], [0], [1], [0, 0, 1, 1], [], []>} : vector<4x4xf32>, vector<4x128xf32>, vector<4x128xf32> -> vector<4x128xf32>
    %6 = arith.addf %0, %5 : vector<4x128xf32>
    %c0_6 = arith.constant 0 : index
    %c0_7 = arith.constant 0 : index
    %c0_8 = arith.constant 0 : index
    %7 = vector.load %arg5[%c0_6, %c0_7, %c0_8] : memref<3x4x4xf32, #tpu.memory_space<vmem>>, vector<1x4x4xf32>
    %8 = vector.shape_cast %7 : vector<1x4x4xf32> to vector<4x4xf32>
    %c0_9 = arith.constant 0 : index
    %c0_10 = arith.constant 0 : index
    %c0_11 = arith.constant 0 : index
    %9 = vector.load %arg3[%c0_9, %c0_10, %c0_11] : memref<1x4x130xf32, #tpu.memory_space<vmem>>, vector<1x4x128xf32>
    %10 = vector.shape_cast %9 : vector<1x4x128xf32> to vector<4x128xf32>
    %cst_12 = arith.constant dense<0.000000e+00> : vector<4x128xf32>
    %11 = tpu.matmul %8, %10, %cst_12 {dimension_numbers = #tpu.dot_dimension_numbers<[1], [0], [0], [1], [0, 0, 1, 1], [], []>} : vector<4x4xf32>, vector<4x128xf32>, vector<4x128xf32> -> vector<4x128xf32>
    %12 = arith.addf %6, %11 : vector<4x128xf32>
    %c1 = arith.constant 1 : index
    %c0_13 = arith.constant 0 : index
    %c0_14 = arith.constant 0 : index
    %13 = vector.load %arg4[%c1, %c0_13, %c0_14] : memref<3x4x4xf32, #tpu.memory_space<vmem>>, vector<1x4x4xf32>
    %14 = vector.shape_cast %13 : vector<1x4x4xf32> to vector<4x4xf32>
    %c0_15 = arith.constant 0 : index
    %c0_16 = arith.constant 0 : index
    %c1_17 = arith.constant 1 : index
    %15 = vector.load %arg2[%c0_15, %c0_16, %c1_17] : memref<1x4x130xf32, #tpu.memory_space<vmem>>, vector<1x4x128xf32>
    %16 = vector.shape_cast %15 : vector<1x4x128xf32> to vector<4x128xf32>
    %cst_18 = arith.constant dense<0.000000e+00> : vector<4x128xf32>
    %17 = tpu.matmul %14, %16, %cst_18 {dimension_numbers = #tpu.dot_dimension_numbers<[1], [0], [0], [1], [0, 0, 1, 1], [], []>} : vector<4x4xf32>, vector<4x128xf32>, vector<4x128xf32> -> vector<4x128xf32>
    %18 = arith.addf %12, %17 : vector<4x128xf32>
    %c1_19 = arith.constant 1 : index
    %c0_20 = arith.constant 0 : index
    %c0_21 = arith.constant 0 : index
    %19 = vector.load %arg5[%c1_19, %c0_20, %c0_21] : memref<3x4x4xf32, #tpu.memory_space<vmem>>, vector<1x4x4xf32>
    %20 = vector.shape_cast %19 : vector<1x4x4xf32> to vector<4x4xf32>
    %c0_22 = arith.constant 0 : index
    %c0_23 = arith.constant 0 : index
    %c1_24 = arith.constant 1 : index
    %21 = vector.load %arg3[%c0_22, %c0_23, %c1_24] : memref<1x4x130xf32, #tpu.memory_space<vmem>>, vector<1x4x128xf32>
    %22 = vector.shape_cast %21 : vector<1x4x128xf32> to vector<4x128xf32>
    %cst_25 = arith.constant dense<0.000000e+00> : vector<4x128xf32>
    %23 = tpu.matmul %20, %22, %cst_25 {dimension_numbers = #tpu.dot_dimension_numbers<[1], [0], [0], [1], [0, 0, 1, 1], [], []>} : vector<4x4xf32>, vector<4x128xf32>, vector<4x128xf32> -> vector<4x128xf32>
    %24 = arith.addf %18, %23 : vector<4x128xf32>
    %c2 = arith.constant 2 : index
    %c0_26 = arith.constant 0 : index
    %c0_27 = arith.constant 0 : index
    %25 = vector.load %arg4[%c2, %c0_26, %c0_27] : memref<3x4x4xf32, #tpu.memory_space<vmem>>, vector<1x4x4xf32>
    %26 = vector.shape_cast %25 : vector<1x4x4xf32> to vector<4x4xf32>
    %c0_28 = arith.constant 0 : index
    %c0_29 = arith.constant 0 : index
    %c2_30 = arith.constant 2 : index
    %27 = vector.load %arg2[%c0_28, %c0_29, %c2_30] : memref<1x4x130xf32, #tpu.memory_space<vmem>>, vector<1x4x128xf32>
    %28 = vector.shape_cast %27 : vector<1x4x128xf32> to vector<4x128xf32>
    %cst_31 = arith.constant dense<0.000000e+00> : vector<4x128xf32>
    %29 = tpu.matmul %26, %28, %cst_31 {dimension_numbers = #tpu.dot_dimension_numbers<[1], [0], [0], [1], [0, 0, 1, 1], [], []>} : vector<4x4xf32>, vector<4x128xf32>, vector<4x128xf32> -> vector<4x128xf32>
    %30 = arith.addf %24, %29 : vector<4x128xf32>
    %c2_32 = arith.constant 2 : index
    %c0_33 = arith.constant 0 : index
    %c0_34 = arith.constant 0 : index
    %31 = vector.load %arg5[%c2_32, %c0_33, %c0_34] : memref<3x4x4xf32, #tpu.memory_space<vmem>>, vector<1x4x4xf32>
    %32 = vector.shape_cast %31 : vector<1x4x4xf32> to vector<4x4xf32>
    %c0_35 = arith.constant 0 : index
    %c0_36 = arith.constant 0 : index
    %c2_37 = arith.constant 2 : index
    %33 = vector.load %arg3[%c0_35, %c0_36, %c2_37] : memref<1x4x130xf32, #tpu.memory_space<vmem>>, vector<1x4x128xf32>
    %34 = vector.shape_cast %33 : vector<1x4x128xf32> to vector<4x128xf32>
    %cst_38 = arith.constant dense<0.000000e+00> : vector<4x128xf32>
    %35 = tpu.matmul %32, %34, %cst_38 {dimension_numbers = #tpu.dot_dimension_numbers<[1], [0], [0], [1], [0, 0, 1, 1], [], []>} : vector<4x4xf32>, vector<4x128xf32>, vector<4x128xf32> -> vector<4x128xf32>
    %36 = arith.addf %30, %35 : vector<4x128xf32>
    %c0_39 = arith.constant 0 : index
    %c0_40 = arith.constant 0 : index
    %37 = vector.load %arg6[%c0_39, %c0_40] : memref<4x1xf32, #tpu.memory_space<vmem>>, vector<4x1xf32>
    %38 = vector.broadcast %37 : vector<4x1xf32> to vector<4x128xf32>
    %39 = arith.addf %36, %38 : vector<4x128xf32>
    %c0_41 = arith.constant 0 : index
    %c0_42 = arith.constant 0 : index
    %c0_43 = arith.constant 0 : index
    %40 = vector.load %arg7[%c0_41, %c0_42, %c0_43] : memref<1x4x128xf32, #tpu.memory_space<vmem>>, vector<1x4x128xf32>
    %41 = vector.shape_cast %40 : vector<1x4x128xf32> to vector<4x128xf32>
    %42 = vector.shape_cast %39 : vector<4x128xf32> to vector<1x4x128xf32>
    tpu.vector_store %arg7[%c0_41, %c0_42, %c0_43], %42 {strides = array<i32>} : memref<1x4x128xf32, #tpu.memory_space<vmem>>, vector<1x4x128xf32>,
    return
  }
  func.func @transform_0(%arg0: i32, %arg1: i32) -> (i32, i32, i32) {
    %c0_i32 = arith.constant 0 : i32
    %c0_i32_0 = arith.constant 0 : i32
    %c0_i32_1 = arith.constant 0 : i32
    return %arg0, %c0_i32, %c0_i32_0 : i32, i32, i32
  }
  func.func @transform_1(%arg0: i32, %arg1: i32) -> (i32, i32, i32) {
    %c0_i32 = arith.constant 0 : i32
    %c0_i32_0 = arith.constant 0 : i32
    %c0_i32_1 = arith.constant 0 : i32
    return %arg0, %c0_i32, %c0_i32_0 : i32, i32, i32
  }
  func.func @transform_2(%arg0: i32, %arg1: i32) -> (i32, i32, i32) {
    %c0_i32 = arith.constant 0 : i32
    %c0_i32_0 = arith.constant 0 : i32
    %c0_i32_1 = arith.constant 0 : i32
    %c0_i32_2 = arith.constant 0 : i32
    return %c0_i32, %c0_i32_0, %c0_i32_1 : i32, i32, i32
  }
  func.func @transform_3(%arg0: i32, %arg1: i32) -> (i32, i32, i32) {
    %c0_i32 = arith.constant 0 : i32
    %c0_i32_0 = arith.constant 0 : i32
    %c0_i32_1 = arith.constant 0 : i32
    %c0_i32_2 = arith.constant 0 : i32
    return %c0_i32, %c0_i32_0, %c0_i32_1 : i32, i32, i32
  }
  func.func @transform_4(%arg0: i32, %arg1: i32) -> (i32, i32) {
    %c0_i32 = arith.constant 0 : i32
    %c0_i32_0 = arith.constant 0 : i32
    %c0_i32_1 = arith.constant 0 : i32
    return %c0_i32, %c0_i32_0 : i32, i32
  }
  func.func @transform_5(%arg0: i32, %arg1: i32) -> (i32, i32, i32) {
    %c0_i32 = arith.constant 0 : i32
    %c0_i32_0 = arith.constant 0 : i32
    return %arg0, %c0_i32, %arg1 : i32, i32, i32
  }
}

</mosaic_0001>

<llo_original>
// kernel: tpu_custom_call.1
$region0: #{tpu_custom_call.1}
  #allocation0 [shape = 'u32[]', space=smem, size = 0x4, offset = 0x4, fixed_abs, tag = 'smem constant byte address 0x4 - core index']
  #allocation1 [shape = 'u32[144,128]{1,0:T(1,128)}', space=vmem, size = 0x12000, scoped, tag = 'internal scratch']
  %s0 = inlined_call_operand.hbm [shape: f32[2,4,130], index: 0, kind: input, shape index: {}]
  %s1 = inlined_call_operand.hbm [shape: f32[2,4,130], index: 1, kind: input, shape index: {}]
  %s2 = inlined_call_operand.vmem [shape: f32[3,4,4], index: 2, kind: input, shape index: {}]
  %s3 = inlined_call_operand.hbm [shape: f32[3,4,4], index: 3, kind: input, shape index: {}]
  %s4 = inlined_call_operand.vmem [shape: f32[4,1], index: 4, kind: input, shape index: {}]
  %s5 = inlined_call_operand.hbm [shape: f32[2,4,128], index: 5, kind: output, shape index: {}]
  %s6 = sld [smem:[#allocation0]]
  $region65: #{tpu_custom_call.1} parent=0
    _
  %s8 = ssub.s32 1, %s6
  %s9 = scalar_select 0, %s8, %s6
  $region1: #{tpu_custom_call.1} parent=0
    #allocation2 [shape = 'u8[8192]{0}', space=vmem, size = 0x2000, scoped, tag = 'input window, operand 0']
    #allocation3 [shape = 's32[2]{0}', space=sflag, size = 0x8, scoped, tag = 'scoped memory for tpu_custom_call.1']
    #allocation4 [shape = 's32[2]{0}', space=sflag, size = 0x8, scoped, tag = 'scoped memory for tpu_custom_call.1']
    #allocation5 [shape = 'u8[8192]{0}', space=vmem, size = 0x2000, scoped, tag = 'input window, operand 1']
    #allocation6 [shape = 's32[2]{0}', space=sflag, size = 0x8, scoped, tag = 'scoped memory for tpu_custom_call.1']
    #allocation7 [shape = 'u8[6144]{0}', space=vmem, size = 0x1800, scoped, tag = 'input window, operand 3, single buffered']
    #allocation8 [shape = 'u8[4096]{0}', space=vmem, size = 0x1000, scoped, tag = 'output window, operand 0']
    %10 = vsyncpa [#allocation3], 0
    %s11 = scalar_lea.sflag [#allocation3], 1
    %12 = vsyncpa %s11, 0
    %13 = vsyncpa [#allocation6], 0
    %s14 = scalar_lea.sflag [#allocation6], 1
    %15 = vsyncpa %s14, 0
    %16 = vsyncpa [#allocation4], 0
    %s17 = scalar_lea.sflag [#allocation4], 1
    %18 = vsyncpa %s17, 0
    loop: start=0, step=1, limit=4
    $region2: #{tpu_custom_call.1} parent=1 // loop_pre_header
      _
    $region3: #{tpu_custom_call.1} parent=1 // loop_header
      %s20 = sphi 0, %s24
      %p21 = scmp.ge.s32.totalorder %s20, 4
      %s27 = sphi 0, %s39
      %s28 = sphi 0, %s35
      %s29 = sphi 0, %s27
      %s30 = sphi 0, %s28
      %s31 = sphi 0, %s29
      %s32 = sphi 0, %s30
      %s42 = sphi 0, %s44
      %s45 = sphi 0, %s42
      %s46 = sphi 0, %s45
      %s62 = sphi 0, %s46
      %s68 = sphi 0, %s70
      %s71 = sphi 0, %s68
      %s72 = sphi 0, %s71
      %s88 = sphi 0, %s72
      %s92 = sphi 0, %s92
      %s94 = sphi 0, %s92
      %s95 = sphi 0, %s94
      %s109 = sphi 0, %s95
      %s113 = sphi 0, %s113
      %s115 = sphi 0, %s113
      %s116 = sphi 0, %s115
      %s130 = sphi 0, %s116
      %s134 = sphi 0, %s134
      %s136 = sphi 0, %s134
      %s137 = sphi 0, %s136
      %s151 = sphi 0, %s137
      %s159 = sphi 0, %s161
      %s162 = sphi 0, %s159
      %s163 = sphi 0, %s162
      %s179 = sphi 0, %s163
    $region4: #{tpu_custom_call.1} parent=1 // loop_header_branch
      %23 = sbr.rel (%p21) target = $region8
    $region5: #{tpu_custom_call.1} parent=1 // loop_body
      %s25 = ssub.s32 %s20, 1
      %s26 = ssub.s32 %s20, 2
      %s33 = sadd.s32 1, %s28
      %p34 = scmp.ge.s32.totalorder %s33, 1
      %s35 = scalar_select %p34, 0, %s33
      %s36 = sadd.s32 1, %s27
      %s37 = scalar_select %p34, %s36, %s27
      %p38 = scmp.ge.s32.totalorder %s37, 2
      %s39 = scalar_select %p38, 0, %s37
      %s40 = ssub.s32 %s27, %s39
      %p41 = scmp.eq.s32.totalorder %s40, 0
      %s43 = sadd.s32 %s42, 1
      %s44 = scalar_select %p41, %s42, %s43
      %p47 = pneg %p41
      %p48 = scmp.eq.s32.totalorder %s20, 1
      %p49 = por %p47, %p48
      %p50 = scmp.ne.s32.totalorder %s42, %s45
      %p51 = scmp.eq.s32.totalorder %s20, 0
      %p52 = por %p50, %p51
      %p53 = scmp.ne.s32.totalorder %s42, %s45
      %p54 = scmp.eq.s32.totalorder %s25, 1
      %p55 = por %p53, %p54
      %p56 = scmp.ne.s32.totalorder %s45, %s46
      %p57 = scmp.eq.s32.totalorder %s25, 0
      %p58 = por %p56, %p57
      %p59 = scmp.ne.s32.totalorder %s45, %s46
      %p60 = scmp.eq.s32.totalorder %s26, 1
      %p61 = por %p59, %p60
      %p63 = scmp.ne.s32.totalorder %s46, %s62
      %p64 = scmp.eq.s32.totalorder %s26, 0
      %p65 = por %p63, %p64
      %s66 = ssub.s32 %s27, %s39
      %p67 = scmp.eq.s32.totalorder %s66, 0
      %s69 = sadd.s32 %s68, 1
      %s70 = scalar_select %p67, %s68, %s69
      %p73 = pneg %p67
      %p74 = scmp.eq.s32.totalorder %s20, 1
      %p75 = por %p73, %p74
      %p76 = scmp.ne.s32.totalorder %s68, %s71
      %p77 = scmp.eq.s32.totalorder %s20, 0
      %p78 = por %p76, %p77
      %p79 = scmp.ne.s32.totalorder %s68, %s71
      %p80 = scmp.eq.s32.totalorder %s25, 1
      %p81 = por %p79, %p80
      %p82 = scmp.ne.s32.totalorder %s71, %s72
      %p83 = scmp.eq.s32.totalorder %s25, 0
      %p84 = por %p82, %p83
      %p85 = scmp.ne.s32.totalorder %s71, %s72
      %p86 = scmp.eq.s32.totalorder %s26, 1
      %p87 = por %p85, %p86
      %p89 = scmp.ne.s32.totalorder %s72, %s88
      %p90 = scmp.eq.s32.totalorder %s26, 0
      %p91 = por %p89, %p90
      %s93 = sadd.s32 %s92, 1
      %p96 = scmp.eq.s32.totalorder %s20, 1
      %p97 = scmp.ne.s32.totalorder %s92, %s94
      %p98 = scmp.eq.s32.totalorder %s20, 0
      %p99 = por %p97, %p98
      %p100 = scmp.ne.s32.totalorder %s92, %s94
      %p101 = scmp.eq.s32.totalorder %s25, 1
      %p102 = por %p100, %p101
      %p103 = scmp.ne.s32.totalorder %s94, %s95
      %p104 = scmp.eq.s32.totalorder %s25, 0
      %p105 = por %p103, %p104
      %p106 = scmp.ne.s32.totalorder %s94, %s95
      %p107 = scmp.eq.s32.totalorder %s26, 1
      %p108 = por %p106, %p107
      %p110 = scmp.ne.s32.totalorder %s95, %s109
      %p111 = scmp.eq.s32.totalorder %s26, 0
      %p112 = por %p110, %p111
      %s114 = sadd.s32 %s113, 1
      %p117 = scmp.eq.s32.totalorder %s20, 1
      %p118 = scmp.ne.s32.totalorder %s113, %s115
      %p119 = scmp.eq.s32.totalorder %s20, 0
      %p120 = por %p118, %p119
      %p121 = scmp.ne.s32.totalorder %s113, %s115
      %p122 = scmp.eq.s32.totalorder %s25, 1
      %p123 = por %p121, %p122
      %p124 = scmp.ne.s32.totalorder %s115, %s116
      %p125 = scmp.eq.s32.totalorder %s25, 0
      %p126 = por %p124, %p125
      %p127 = scmp.ne.s32.totalorder %s115, %s116
      %p128 = scmp.eq.s32.totalorder %s26, 1
      %p129 = por %p127, %p128
      %p131 = scmp.ne.s32.totalorder %s116, %s130
      %p132 = scmp.eq.s32.totalorder %s26, 0
      %p133 = por %p131, %p132
      %s135 = sadd.s32 %s134, 1
      %p138 = scmp.eq.s32.totalorder %s20, 1
      %p139 = scmp.ne.s32.totalorder %s134, %s136
      %p140 = scmp.eq.s32.totalorder %s20, 0
      %p141 = por %p139, %p140
      %p142 = scmp.ne.s32.totalorder %s134, %s136
      %p143 = scmp.eq.s32.totalorder %s25, 1
      %p144 = por %p142, %p143
      %p145 = scmp.ne.s32.totalorder %s136, %s137
      %p146 = scmp.eq.s32.totalorder %s25, 0
      %p147 = por %p145, %p146
      %p148 = scmp.ne.s32.totalorder %s136, %s137
      %p149 = scmp.eq.s32.totalorder %s26, 1
      %p150 = por %p148, %p149
      %p152 = scmp.ne.s32.totalorder %s137, %s151
      %p153 = scmp.eq.s32.totalorder %s26, 0
      %p154 = por %p152, %p153
      %s155 = ssub.s32 %s27, %s39
      %s156 = ssub.s32 %s28, %s35
      %s157 = sor.u32 %s155, %s156
      %p158 = scmp.eq.s32.totalorder %s157, 0
      %s160 = sadd.s32 %s159, 1
      %s161 = scalar_select %p158, %s159, %s160
      %p164 = pneg %p158
      %p165 = scmp.eq.s32.totalorder %s20, 1
      %p166 = por %p164, %p165
      %p167 = scmp.ne.s32.totalorder %s159, %s162
      %p168 = scmp.eq.s32.totalorder %s20, 0
      %p169 = por %p167, %p168
      %p170 = scmp.ne.s32.totalorder %s159, %s162
      %p171 = scmp.eq.s32.totalorder %s25, 1
      %p172 = por %p170, %p171
      %p173 = scmp.ne.s32.totalorder %s162, %s163
      %p174 = scmp.eq.s32.totalorder %s25, 0
      %p175 = por %p173, %p174
      %p176 = scmp.ne.s32.totalorder %s162, %s163
      %p177 = scmp.eq.s32.totalorder %s26, 1
      %p178 = por %p176, %p177
      %p180 = scmp.ne.s32.totalorder %s163, %s179
      %p181 = scmp.eq.s32.totalorder %s26, 0
      %p182 = por %p180, %p181
      %p183 = scmp.le.s32.totalorder 1, %s20
      %p184 = scmp.lt.s32.totalorder %s20, 3
      %p185 = pnand %p183, %p184
      %p186 = pneg %p185
      // Predicated region
      $region9: #{tpu_custom_call.1} parent=5 // pred_check
        _
      $region10: #{tpu_custom_call.1} parent=5 // pred_check_branch
        %188 = sbr.rel (%p185) target = $region12
      $region11: #{tpu_custom_call.1} parent=5 // pred_region
        %s189 = ssub.s32 %s20, 1
        // Predicated region
        $region13: #{tpu_custom_call.1} parent=11 // pred_check
          %p190 = pneg %p105
        $region14: #{tpu_custom_call.1} parent=11 // pred_check_branch
          %192 = sbr.rel (%p190) target = $region16
        $region15: #{tpu_custom_call.1} parent=11 // pred_region
          _
        $region16: #{tpu_custom_call.1} parent=11 // pred_fallthru
          _
        // Predicated region
        $region17: #{tpu_custom_call.1} parent=11 // pred_check
          %p193 = pneg %p126
        $region18: #{tpu_custom_call.1} parent=11 // pred_check_branch
          %195 = sbr.rel (%p193) target = $region20
        $region19: #{tpu_custom_call.1} parent=11 // pred_region
          %s197 = ssub.s32 192, 192
          %198 = vsyncadd [#allocation6], %s197
          %s199 = sshll.u32 [#allocation7], 4
          %s200 = int_to_ptr.vmem [resolvable:$true] %s199
          %205 = dma.hbm_to_vmem [thread:$0]  %s3, 192, %s200, [#allocation6], 64, 64, 4
        $region20: #{tpu_custom_call.1} parent=11 // pred_fallthru
          _
        // Predicated region
        $region21: #{tpu_custom_call.1} parent=11 // pred_check
          %p206 = pneg %p147
        $region22: #{tpu_custom_call.1} parent=11 // pred_check_branch
          %208 = sbr.rel (%p206) target = $region24
        $region23: #{tpu_custom_call.1} parent=11 // pred_region
          _
        $region24: #{tpu_custom_call.1} parent=11 // pred_fallthru
          _
      $region12: #{tpu_custom_call.1} parent=5 // pred_fallthru
        _
      %p209 = scmp.lt.s32.totalorder %s20, 2
      // Predicated region
      $region25: #{tpu_custom_call.1} parent=5 // pred_check
        %p210 = pneg %p209
      $region26: #{tpu_custom_call.1} parent=5 // pred_check_branch
        %212 = sbr.rel (%p210) target = $region28
      $region27: #{tpu_custom_call.1} parent=5 // pred_region
        // Predicated region
        $region29: #{tpu_custom_call.1} parent=27 // pred_check
          %p213 = pneg %p52
        $region30: #{tpu_custom_call.1} parent=27 // pred_check_branch
          %215 = sbr.rel (%p213) target = $region32
        $region31: #{tpu_custom_call.1} parent=27 // pred_region
          %s216 = sand.u32 %s42, 1
          %s217 = scalar_lea.sflag [#allocation3], %s216
          %s218 = sand.u32 %s42, 1
          %s219 = smul.addr %s218, 8
          %s220 = scalar_lea.vmem [#allocation2], %s219
          %s222 = ssub.s32 128, 128
          %223 = vsyncadd %s217, %s222
          %s224 = smul.addr %s27, 2
          %s225 = smul.addr %s224, 64
          %s226 = scalar_lea.hbm %s0, %s225
          %s228 = sshll.u32 %s220, 4
          %s229 = int_to_ptr.vmem [resolvable:$true] %s228
          %231 = dma.hbm_to_vmem [thread:$0]  %s226, 128, %s229, %s217
        $region32: #{tpu_custom_call.1} parent=27 // pred_fallthru
          _
        // Predicated region
        $region33: #{tpu_custom_call.1} parent=27 // pred_check
          %p232 = pneg %p78
        $region34: #{tpu_custom_call.1} parent=27 // pred_check_branch
          %234 = sbr.rel (%p232) target = $region36
        $region35: #{tpu_custom_call.1} parent=27 // pred_region
          %s235 = sand.u32 %s20, 1
          %s236 = scalar_lea.sflag [#allocation6], %s235
          %s237 = sand.u32 %s68, 1
          %s238 = smul.addr %s237, 8
          %s239 = scalar_lea.vmem [#allocation5], %s238
          %s241 = ssub.s32 128, 128
          %242 = vsyncadd %s236, %s241
          %s243 = smul.addr %s27, 2
          %s244 = smul.addr %s243, 64
          %s245 = scalar_lea.hbm %s1, %s244
          %s247 = sshll.u32 %s239, 4
          %s248 = int_to_ptr.vmem [resolvable:$true] %s247
          %250 = dma.hbm_to_vmem [thread:$0]  %s245, 128, %s248, %s236
        $region36: #{tpu_custom_call.1} parent=27 // pred_fallthru
          _
      $region28: #{tpu_custom_call.1} parent=5 // pred_fallthru
        _
      %p251 = scmp.le.s32.totalorder 1, %s20
      %p252 = scmp.lt.s32.totalorder %s20, 3
      %p253 = pnand %p251, %p252
      %p254 = pneg %p253
      // Predicated region
      $region37: #{tpu_custom_call.1} parent=5 // pred_check
        _
      $region38: #{tpu_custom_call.1} parent=5 // pred_check_branch
        %256 = sbr.rel (%p253) target = $region40
      $region39: #{tpu_custom_call.1} parent=5 // pred_region
        %s257 = ssub.s32 %s20, 1
        %s258 = sand.u32 %s45, 1
        %s259 = scalar_lea.sflag [#allocation3], %s258
        %s260 = sand.u32 %s45, 1
        %s261 = smul.addr %s260, 8
        %s262 = scalar_lea.vmem [#allocation2], %s261
        // Predicated region
        $region41: #{tpu_custom_call.1} parent=39 // pred_check
          %p263 = pneg %p58
        $region42: #{tpu_custom_call.1} parent=39 // pred_check_branch
          %265 = sbr.rel (%p263) target = $region44
        $region43: #{tpu_custom_call.1} parent=39 // pred_region
          %266 = dma.done %s259, 128
        $region44: #{tpu_custom_call.1} parent=39 // pred_fallthru
          _
        %s267 = sand.u32 %s25, 1
        %s268 = scalar_lea.sflag [#allocation6], %s267
        %s269 = sand.u32 %s71, 1
        %s270 = smul.addr %s269, 8
        %s271 = scalar_lea.vmem [#allocation5], %s270
        // Predicated region
        $region45: #{tpu_custom_call.1} parent=39 // pred_check
          %p272 = pneg %p84
        $region46: #{tpu_custom_call.1} parent=39 // pred_check_branch
          %274 = sbr.rel (%p272) target = $region48
        $region47: #{tpu_custom_call.1} parent=39 // pred_region
          %275 = dma.done %s268, 128
        $region48: #{tpu_custom_call.1} parent=39 // pred_fallthru
          _
        // Predicated region
        $region49: #{tpu_custom_call.1} parent=39 // pred_check
          %p276 = pneg %p126
        $region50: #{tpu_custom_call.1} parent=39 // pred_check_branch
          %278 = sbr.rel (%p276) target = $region52
        $region51: #{tpu_custom_call.1} parent=39 // pred_region
          %279 = dma.done [#allocation6], 192
        $region52: #{tpu_custom_call.1} parent=39 // pred_fallthru
          _
        %s280 = sand.u32 %s45, 1
        %s281 = scalar_lea.sflag [#allocation3], %s280
        %s282 = sand.u32 %s45, 1
        %s283 = smul.addr %s282, 8
        %s284 = scalar_lea.vmem [#allocation2], %s283
        %p285 = pneg %p58
        %p286 = pneg %p55
        %s287 = sand.u32 %s25, 1
        %s288 = scalar_lea.sflag [#allocation6], %s287
        %s289 = sand.u32 %s71, 1
        %s290 = smul.addr %s289, 8
        %s291 = scalar_lea.vmem [#allocation5], %s290
        %p292 = pneg %p84
        %p293 = pneg %p81
        %p294 = pneg %p105
        %p295 = pneg %p102
        %p296 = pneg %p126
        %p297 = pneg %p123
        %p298 = pneg %p147
        %p299 = pneg %p144
        %p300 = pneg %p175
        %p301 = pneg %p172
        %s302 = sand.u32 %s162, 1
        %s303 = scalar_lea.sflag [#allocation4], %s302
        %s304 = sand.u32 %s162, 1
        %s305 = smul.addr %s304, 4
        %s306 = scalar_lea.vmem [#allocation8], %s305
        %v307 = vld [vmem:[%s2] sm:$0xf]
        %v308 = vld [vmem:[%s262] sm:$0xf]
        %v309 = vld [vmem:[#allocation7] sm:$0xf]
        %v310 = vld [vmem:[%s271] sm:$0xf]
        %vm311 = vcmask 31744
        %v313 = vsel %vm311, %v309, 0
        %vm315 = vcmask 1043456
        %v317 = vsel %vm315, %v310, 0
        %319 = vmatprep.subr.mxu0 0.0
        %320 = vmatpush1.msra.mxu0 %v317
        %321 = vmatprep.subr.mxu0 0.0
        %322 = vmatpush1.msra.mxu0 0.0
        %323 = vmatprep.subr.mxu0 0.0
        %324 = vmatpush1.msra.mxu0 0.0
        %325 = vmatprep.subr.mxu0 0.0
        %326 = vmatpush1.msra.mxu0 0.0
        %327 = vmatprep.subr.mxu0 0.0
        %328 = vmatpush1.msra.mxu0 0.0
        %329 = vmatprep.subr.mxu0 0.0
        %330 = vmatpush1.msra.mxu0 0.0
        %331 = vmatprep.subr.mxu0 0.0
        %332 = vmatpush1.msra.mxu0 0.0
        %333 = vmatprep.subr.mxu0 0.0
        %334 = vmatpush1.msra.mxu0 0.0
        %335 = vmatprep.subr.mxu0 0.0
        %336 = vmatpush1.msra.mxu0 0.0
        %337 = vmatprep.subr.mxu0 0.0
        %338 = vmatpush1.msra.mxu0 0.0
        %339 = vmatprep.subr.mxu0 0.0
        %340 = vmatpush1.msra.mxu0 0.0
        %341 = vmatprep.subr.mxu0 0.0
        %342 = vmatpush1.msra.mxu0 0.0
        %343 = vmatprep.subr.mxu0 0.0
        %344 = vmatpush1.msra.mxu0 0.0
        %345 = vmatprep.subr.mxu0 0.0
        %346 = vmatpush1.msra.mxu0 0.0
        %347 = vmatprep.subr.mxu0 0.0
        %348 = vmatpush1.msra.mxu0 0.0
        %349 = vmatprep.subr.mxu0 0.0
        %350 = vmatpush1.msra.mxu0 0.0
        %351 = vmatprep.subr.mxu0 0.0
        %352 = vmatpush1.msra.mxu0 0.0
        %353 = vmatprep.subr.mxu0 0.0
        %354 = vmatpush1.msra.mxu0 0.0
        %355 = vmatprep.subr.mxu0 0.0
        %356 = vmatpush1.msra.mxu0 0.0
        %357 = vmatprep.subr.mxu0 0.0
        %358 = vmatpush1.msra.mxu0 0.0
        %359 = vmatprep.subr.mxu0 0.0
        %360 = vmatpush1.msra.mxu0 0.0
        %361 = vmatprep.subr.mxu0 0.0
        %362 = vmatpush1.msra.mxu0 0.0
        %363 = vmatprep.subr.mxu0 0.0
        %364 = vmatpush1.msra.mxu0 0.0
        %365 = vmatprep.subr.mxu0 0.0
        %366 = vmatpush1.msra.mxu0 0.0
        %367 = vmatprep.subr.mxu0 0.0
        %368 = vmatpush1.msra.mxu0 0.0
        %369 = vmatprep.subr.mxu0 0.0
        %370 = vmatpush1.msra.mxu0 0.0
        %371 = vmatprep.subr.mxu0 0.0
        %372 = vmatpush1.msra.mxu0 0.0
        %373 = vmatprep.subr.mxu0 0.0
        %374 = vmatpush1.msra.mxu0 0.0
        %375 = vmatprep.subr.mxu0 0.0
        %376 = vmatpush1.msra.mxu0 0.0
        %377 = vmatprep.subr.mxu0 0.0
        %378 = vmatpush1.msra.mxu0 0.0
        %379 = vmatprep.subr.mxu0 0.0
        %380 = vmatpush1.msra.mxu0 0.0
        %381 = vmatprep.subr.mxu0 0.0
        %382 = vmatpush1.msra.mxu0 0.0
        %383 = vmatprep.mubr.f32.mxu0 0.0
        %384 = vmatmul.mubr.f32.gmra.mrb[0].mxu0 %v313
        %v385 = vpop.f32.mrb[0].mxu0
        %v386 = vadd.f32 0.0, %v385
        %v387 = vpop.f32.mrb[0].mxu0
        %388 = vdwg.mxu0
        %v390 = vsel %vm311, %v307, 0
        %v393 = vsel %vm315, %v308, 0
        %395 = vmatprep.subr.mxu0 0.0
        %396 = vmatpush1.msra.mxu0 %v393
        %397 = vmatprep.subr.mxu0 0.0
        %398 = vmatpush1.msra.mxu0 0.0
        %399 = vmatprep.subr.mxu0 0.0
        %400 = vmatpush1.msra.mxu0 0.0
        %401 = vmatprep.subr.mxu0 0.0
        %402 = vmatpush1.msra.mxu0 0.0
        %403 = vmatprep.subr.mxu0 0.0
        %404 = vmatpush1.msra.mxu0 0.0
        %405 = vmatprep.subr.mxu0 0.0
        %406 = vmatpush1.msra.mxu0 0.0
        %407 = vmatprep.subr.mxu0 0.0
        %408 = vmatpush1.msra.mxu0 0.0
        %409 = vmatprep.subr.mxu0 0.0
        %410 = vmatpush1.msra.mxu0 0.0
        %411 = vmatprep.subr.mxu0 0.0
        %412 = vmatpush1.msra.mxu0 0.0
        %413 = vmatprep.subr.mxu0 0.0
        %414 = vmatpush1.msra.mxu0 0.0
        %415 = vmatprep.subr.mxu0 0.0
        %416 = vmatpush1.msra.mxu0 0.0
        %417 = vmatprep.subr.mxu0 0.0
        %418 = vmatpush1.msra.mxu0 0.0
        %419 = vmatprep.subr.mxu0 0.0
        %420 = vmatpush1.msra.mxu0 0.0
        %421 = vmatprep.subr.mxu0 0.0
        %422 = vmatpush1.msra.mxu0 0.0
        %423 = vmatprep.subr.mxu0 0.0
        %424 = vmatpush1.msra.mxu0 0.0
        %425 = vmatprep.subr.mxu0 0.0
        %426 = vmatpush1.msra.mxu0 0.0
        %427 = vmatprep.subr.mxu0 0.0
        %428 = vmatpush1.msra.mxu0 0.0
        %429 = vmatprep.subr.mxu0 0.0
        %430 = vmatpush1.msra.mxu0 0.0
        %431 = vmatprep.subr.mxu0 0.0
        %432 = vmatpush1.msra.mxu0 0.0
        %433 = vmatprep.subr.mxu0 0.0
        %434 = vmatpush1.msra.mxu0 0.0
        %435 = vmatprep.subr.mxu0 0.0
        %436 = vmatpush1.msra.mxu0 0.0
        %437 = vmatprep.subr.mxu0 0.0
        %438 = vmatpush1.msra.mxu0 0.0
        %439 = vmatprep.subr.mxu0 0.0
        %440 = vmatpush1.msra.mxu0 0.0
        %441 = vmatprep.subr.mxu0 0.0
        %442 = vmatpush1.msra.mxu0 0.0
        %443 = vmatprep.subr.mxu0 0.0
        %444 = vmatpush1.msra.mxu0 0.0
        %445 = vmatprep.subr.mxu0 0.0
        %446 = vmatpush1.msra.mxu0 0.0
        %447 = vmatprep.subr.mxu0 0.0
        %448 = vmatpush1.msra.mxu0 0.0
        %449 = vmatprep.subr.mxu0 0.0
        %450 = vmatpush1.msra.mxu0 0.0
        %451 = vmatprep.subr.mxu0 0.0
        %452 = vmatpush1.msra.mxu0 0.0
        %453 = vmatprep.subr.mxu0 0.0
        %454 = vmatpush1.msra.mxu0 0.0
        %455 = vmatprep.subr.mxu0 0.0
        %456 = vmatpush1.msra.mxu0 0.0
        %457 = vmatprep.subr.mxu0 0.0
        %458 = vmatpush1.msra.mxu0 0.0
        %459 = vmatprep.mubr.f32.mxu0 0.0
        %460 = vmatmul.mubr.f32.gmra.mrb[0].mxu0 %v390
        %v461 = vpop.f32.mrb[0].mxu0
        %v462 = vadd.f32 %v386, %v461
        %v463 = vpop.f32.mrb[0].mxu0
        %464 = vdwg.mxu0
        %s465 = scalar_lea.vmem %s2, 4
        %v466 = vld [vmem:[%s465] sm:$0xf]
        %v467 = vld [vmem:[%s262] sm:$0xff]
        %v469 = vcombine.high %v467, %v467
        %470 = vrot.lane.b32.xlu0 %v467, 127
        %v471 = vpop.permute.xlu0 %470
        %472 = vrot.lane.b32.xlu0 %v469, 127
        %v473 = vpop.permute.xlu0 %472
        %vm474 = vcmask 1039360
        %v475 = vsel %vm474, %v471, %v473
        %v477 = vsel %vm311, %v466, 0
        %v479 = vsel %vm315, %v475, 0
        %481 = vmatprep.subr.mxu0 0.0
        %482 = vmatpush1.msra.mxu0 %v479
        %483 = vmatprep.subr.mxu0 0.0
        %484 = vmatpush1.msra.mxu0 0.0
        %485 = vmatprep.subr.mxu0 0.0
        %486 = vmatpush1.msra.mxu0 0.0
        %487 = vmatprep.subr.mxu0 0.0
        %488 = vmatpush1.msra.mxu0 0.0
        %489 = vmatprep.subr.mxu0 0.0
        %490 = vmatpush1.msra.mxu0 0.0
        %491 = vmatprep.subr.mxu0 0.0
        %492 = vmatpush1.msra.mxu0 0.0
        %493 = vmatprep.subr.mxu0 0.0
        %494 = vmatpush1.msra.mxu0 0.0
        %495 = vmatprep.subr.mxu0 0.0
        %496 = vmatpush1.msra.mxu0 0.0
        %497 = vmatprep.subr.mxu0 0.0
        %498 = vmatpush1.msra.mxu0 0.0
        %499 = vmatprep.subr.mxu0 0.0
        %500 = vmatpush1.msra.mxu0 0.0
        %501 = vmatprep.subr.mxu0 0.0
        %502 = vmatpush1.msra.mxu0 0.0
        %503 = vmatprep.subr.mxu0 0.0
        %504 = vmatpush1.msra.mxu0 0.0
        %505 = vmatprep.subr.mxu0 0.0
        %506 = vmatpush1.msra.mxu0 0.0
        %507 = vmatprep.subr.mxu0 0.0
        %508 = vmatpush1.msra.mxu0 0.0
        %509 = vmatprep.subr.mxu0 0.0
        %510 = vmatpush1.msra.mxu0 0.0
        %511 = vmatprep.subr.mxu0 0.0
        %512 = vmatpush1.msra.mxu0 0.0
        %513 = vmatprep.subr.mxu0 0.0
        %514 = vmatpush1.msra.mxu0 0.0
        %515 = vmatprep.subr.mxu0 0.0
        %516 = vmatpush1.msra.mxu0 0.0
        %517 = vmatprep.subr.mxu0 0.0
        %518 = vmatpush1.msra.mxu0 0.0
        %519 = vmatprep.subr.mxu0 0.0
        %520 = vmatpush1.msra.mxu0 0.0
        %521 = vmatprep.subr.mxu0 0.0
        %522 = vmatpush1.msra.mxu0 0.0
        %523 = vmatprep.subr.mxu0 0.0
        %524 = vmatpush1.msra.mxu0 0.0
        %525 = vmatprep.subr.mxu0 0.0
        %526 = vmatpush1.msra.mxu0 0.0
        %527 = vmatprep.subr.mxu0 0.0
        %528 = vmatpush1.msra.mxu0 0.0
        %529 = vmatprep.subr.mxu0 0.0
        %530 = vmatpush1.msra.mxu0 0.0
        %531 = vmatprep.subr.mxu0 0.0
        %532 = vmatpush1.msra.mxu0 0.0
        %533 = vmatprep.subr.mxu0 0.0
        %534 = vmatpush1.msra.mxu0 0.0
        %535 = vmatprep.subr.mxu0 0.0
        %536 = vmatpush1.msra.mxu0 0.0
        %537 = vmatprep.subr.mxu0 0.0
        %538 = vmatpush1.msra.mxu0 0.0
        %539 = vmatprep.subr.mxu0 0.0
        %540 = vmatpush1.msra.mxu0 0.0
        %541 = vmatprep.subr.mxu0 0.0
        %542 = vmatpush1.msra.mxu0 0.0
        %543 = vmatprep.subr.mxu0 0.0
        %544 = vmatpush1.msra.mxu0 0.0
        %545 = vmatprep.mubr.f32.mxu0 0.0
        %546 = vmatmul.mubr.f32.gmra.mrb[0].mxu0 %v477
        %v547 = vpop.f32.mrb[0].mxu0
        %v548 = vadd.f32 0.0, %v547
        %v549 = vpop.f32.mrb[0].mxu0
        %550 = vdwg.mxu0
        %v551 = vadd.f32 %v462, %v548
        %s552 = scalar_lea.vmem [#allocation7], 4
        %v553 = vld [vmem:[%s552] sm:$0xf]
        %v554 = vld [vmem:[%s271] sm:$0xff]
        %v556 = vcombine.high %v554, %v554
        %557 = vrot.lane.b32.xlu0 %v554, 127
        %v558 = vpop.permute.xlu0 %557
        %559 = vrot.lane.b32.xlu0 %v556, 127
        %v560 = vpop.permute.xlu0 %559
        %v561 = vsel %vm474, %v558, %v560
        %v563 = vsel %vm311, %v553, 0
        %v565 = vsel %vm315, %v561, 0
        %567 = vmatprep.subr.mxu0 0.0
        %568 = vmatpush1.msra.mxu0 %v565
        %569 = vmatprep.subr.mxu0 0.0
        %570 = vmatpush1.msra.mxu0 0.0
        %571 = vmatprep.subr.mxu0 0.0
        %572 = vmatpush1.msra.mxu0 0.0
        %573 = vmatprep.subr.mxu0 0.0
        %574 = vmatpush1.msra.mxu0 0.0
        %575 = vmatprep.subr.mxu0 0.0
        %576 = vmatpush1.msra.mxu0 0.0
        %577 = vmatprep.subr.mxu0 0.0
        %578 = vmatpush1.msra.mxu0 0.0
        %579 = vmatprep.subr.mxu0 0.0
        %580 = vmatpush1.msra.mxu0 0.0
        %581 = vmatprep.subr.mxu0 0.0
        %582 = vmatpush1.msra.mxu0 0.0
        %583 = vmatprep.subr.mxu0 0.0
        %584 = vmatpush1.msra.mxu0 0.0
        %585 = vmatprep.subr.mxu0 0.0
        %586 = vmatpush1.msra.mxu0 0.0
        %587 = vmatprep.subr.mxu0 0.0
        %588 = vmatpush1.msra.mxu0 0.0
        %589 = vmatprep.subr.mxu0 0.0
        %590 = vmatpush1.msra.mxu0 0.0
        %591 = vmatprep.subr.mxu0 0.0
        %592 = vmatpush1.msra.mxu0 0.0
        %593 = vmatprep.subr.mxu0 0.0
        %594 = vmatpush1.msra.mxu0 0.0
        %595 = vmatprep.subr.mxu0 0.0
        %596 = vmatpush1.msra.mxu0 0.0
        %597 = vmatprep.subr.mxu0 0.0
        %598 = vmatpush1.msra.mxu0 0.0
        %599 = vmatprep.subr.mxu0 0.0
        %600 = vmatpush1.msra.mxu0 0.0
        %601 = vmatprep.subr.mxu0 0.0
        %602 = vmatpush1.msra.mxu0 0.0
        %603 = vmatprep.subr.mxu0 0.0
        %604 = vmatpush1.msra.mxu0 0.0
        %605 = vmatprep.subr.mxu0 0.0
        %606 = vmatpush1.msra.mxu0 0.0
        %607 = vmatprep.subr.mxu0 0.0
        %608 = vmatpush1.msra.mxu0 0.0
        %609 = vmatprep.subr.mxu0 0.0
        %610 = vmatpush1.msra.mxu0 0.0
        %611 = vmatprep.subr.mxu0 0.0
        %612 = vmatpush1.msra.mxu0 0.0
        %613 = vmatprep.subr.mxu0 0.0
        %614 = vmatpush1.msra.mxu0 0.0
        %615 = vmatprep.subr.mxu0 0.0
        %616 = vmatpush1.msra.mxu0 0.0
        %617 = vmatprep.subr.mxu0 0.0
        %618 = vmatpush1.msra.mxu0 0.0
        %619 = vmatprep.subr.mxu0 0.0
        %620 = vmatpush1.msra.mxu0 0.0
        %621 = vmatprep.subr.mxu0 0.0
        %622 = vmatpush1.msra.mxu0 0.0
        %623 = vmatprep.subr.mxu0 0.0
        %624 = vmatpush1.msra.mxu0 0.0
        %625 = vmatprep.subr.mxu0 0.0
        %626 = vmatpush1.msra.mxu0 0.0
        %627 = vmatprep.subr.mxu0 0.0
        %628 = vmatpush1.msra.mxu0 0.0
        %629 = vmatprep.subr.mxu0 0.0
        %630 = vmatpush1.msra.mxu0 0.0
        %631 = vmatprep.mubr.f32.mxu0 0.0
        %632 = vmatmul.mubr.f32.gmra.mrb[0].mxu0 %v563
        %v633 = vpop.f32.mrb[0].mxu0
        %v634 = vadd.f32 0.0, %v633
        %v635 = vpop.f32.mrb[0].mxu0
        %636 = vdwg.mxu0
        %v637 = vadd.f32 %v551, %v634
        %s638 = scalar_lea.vmem %s2, 8
        %v639 = vld [vmem:[%s638] sm:$0xf]
        %v640 = vld [vmem:[%s262] sm:$0xff]
        %v642 = vcombine.high %v640, %v640
        %643 = vrot.lane.b32.xlu0 %v640, 126
        %v644 = vpop.permute.xlu0 %643
        %645 = vrot.lane.b32.xlu0 %v642, 126
        %v646 = vpop.permute.xlu0 %645
        %vm647 = vcmask 1031168
        %v648 = vsel %vm647, %v644, %v646
        %v650 = vsel %vm311, %v639, 0
        %v652 = vsel %vm315, %v648, 0
        %654 = vmatprep.subr.mxu0 0.0
        %655 = vmatpush1.msra.mxu0 %v652
        %656 = vmatprep.subr.mxu0 0.0
        %657 = vmatpush1.msra.mxu0 0.0
        %658 = vmatprep.subr.mxu0 0.0
        %659 = vmatpush1.msra.mxu0 0.0
        %660 = vmatprep.subr.mxu0 0.0
        %661 = vmatpush1.msra.mxu0 0.0
        %662 = vmatprep.subr.mxu0 0.0
        %663 = vmatpush1.msra.mxu0 0.0
        %664 = vmatprep.subr.mxu0 0.0
        %665 = vmatpush1.msra.mxu0 0.0
        %666 = vmatprep.subr.mxu0 0.0
        %667 = vmatpush1.msra.mxu0 0.0
        %668 = vmatprep.subr.mxu0 0.0
        %669 = vmatpush1.msra.mxu0 0.0
        %670 = vmatprep.subr.mxu0 0.0
        %671 = vmatpush1.msra.mxu0 0.0
        %672 = vmatprep.subr.mxu0 0.0
        %673 = vmatpush1.msra.mxu0 0.0
        %674 = vmatprep.subr.mxu0 0.0
        %675 = vmatpush1.msra.mxu0 0.0
        %676 = vmatprep.subr.mxu0 0.0
        %677 = vmatpush1.msra.mxu0 0.0
        %678 = vmatprep.subr.mxu0 0.0
        %679 = vmatpush1.msra.mxu0 0.0
        %680 = vmatprep.subr.mxu0 0.0
        %681 = vmatpush1.msra.mxu0 0.0
        %682 = vmatprep.subr.mxu0 0.0
        %683 = vmatpush1.msra.mxu0 0.0
        %684 = vmatprep.subr.mxu0 0.0
        %685 = vmatpush1.msra.mxu0 0.0
        %686 = vmatprep.subr.mxu0 0.0
        %687 = vmatpush1.msra.mxu0 0.0
        %688 = vmatprep.subr.mxu0 0.0
        %689 = vmatpush1.msra.mxu0 0.0
        %690 = vmatprep.subr.mxu0 0.0
        %691 = vmatpush1.msra.mxu0 0.0
        %692 = vmatprep.subr.mxu0 0.0
        %693 = vmatpush1.msra.mxu0 0.0
        %694 = vmatprep.subr.mxu0 0.0
        %695 = vmatpush1.msra.mxu0 0.0
        %696 = vmatprep.subr.mxu0 0.0
        %697 = vmatpush1.msra.mxu0 0.0
        %698 = vmatprep.subr.mxu0 0.0
        %699 = vmatpush1.msra.mxu0 0.0
        %700 = vmatprep.subr.mxu0 0.0
        %701 = vmatpush1.msra.mxu0 0.0
        %702 = vmatprep.subr.mxu0 0.0
        %703 = vmatpush1.msra.mxu0 0.0
        %704 = vmatprep.subr.mxu0 0.0
        %705 = vmatpush1.msra.mxu0 0.0
        %706 = vmatprep.subr.mxu0 0.0
        %707 = vmatpush1.msra.mxu0 0.0
        %708 = vmatprep.subr.mxu0 0.0
        %709 = vmatpush1.msra.mxu0 0.0
        %710 = vmatprep.subr.mxu0 0.0
        %711 = vmatpush1.msra.mxu0 0.0
        %712 = vmatprep.subr.mxu0 0.0
        %713 = vmatpush1.msra.mxu0 0.0
        %714 = vmatprep.subr.mxu0 0.0
        %715 = vmatpush1.msra.mxu0 0.0
        %716 = vmatprep.subr.mxu0 0.0
        %717 = vmatpush1.msra.mxu0 0.0
        %718 = vmatprep.mubr.f32.mxu0 0.0
        %719 = vmatmul.mubr.f32.gmra.mrb[0].mxu0 %v650
        %v720 = vpop.f32.mrb[0].mxu0
        %v721 = vadd.f32 0.0, %v720
        %v722 = vpop.f32.mrb[0].mxu0
        %723 = vdwg.mxu0
        %v724 = vadd.f32 %v637, %v721
        %s725 = scalar_lea.vmem [#allocation7], 8
        %v726 = vld [vmem:[%s725] sm:$0xf]
        %v727 = vld [vmem:[%s271] sm:$0xff]
        %v729 = vcombine.high %v727, %v727
        %730 = vrot.lane.b32.xlu0 %v727, 126
        %v731 = vpop.permute.xlu0 %730
        %732 = vrot.lane.b32.xlu0 %v729, 126
        %v733 = vpop.permute.xlu0 %732
        %v734 = vsel %vm647, %v731, %v733
        %v736 = vsel %vm311, %v726, 0
        %v738 = vsel %vm315, %v734, 0
        %740 = vmatprep.subr.mxu0 0.0
        %741 = vmatpush1.msra.mxu0 %v738
        %742 = vmatprep.subr.mxu0 0.0
        %743 = vmatpush1.msra.mxu0 0.0
        %744 = vmatprep.subr.mxu0 0.0
        %745 = vmatpush1.msra.mxu0 0.0
        %746 = vmatprep.subr.mxu0 0.0
        %747 = vmatpush1.msra.mxu0 0.0
        %748 = vmatprep.subr.mxu0 0.0
        %749 = vmatpush1.msra.mxu0 0.0
        %750 = vmatprep.subr.mxu0 0.0
        %751 = vmatpush1.msra.mxu0 0.0
        %752 = vmatprep.subr.mxu0 0.0
        %753 = vmatpush1.msra.mxu0 0.0
        %754 = vmatprep.subr.mxu0 0.0
        %755 = vmatpush1.msra.mxu0 0.0
        %756 = vmatprep.subr.mxu0 0.0
        %757 = vmatpush1.msra.mxu0 0.0
        %758 = vmatprep.subr.mxu0 0.0
        %759 = vmatpush1.msra.mxu0 0.0
        %760 = vmatprep.subr.mxu0 0.0
        %761 = vmatpush1.msra.mxu0 0.0
        %762 = vmatprep.subr.mxu0 0.0
        %763 = vmatpush1.msra.mxu0 0.0
        %764 = vmatprep.subr.mxu0 0.0
        %765 = vmatpush1.msra.mxu0 0.0
        %766 = vmatprep.subr.mxu0 0.0
        %767 = vmatpush1.msra.mxu0 0.0
        %768 = vmatprep.subr.mxu0 0.0
        %769 = vmatpush1.msra.mxu0 0.0
        %770 = vmatprep.subr.mxu0 0.0
        %771 = vmatpush1.msra.mxu0 0.0
        %772 = vmatprep.subr.mxu0 0.0
        %773 = vmatpush1.msra.mxu0 0.0
        %774 = vmatprep.subr.mxu0 0.0
        %775 = vmatpush1.msra.mxu0 0.0
        %776 = vmatprep.subr.mxu0 0.0
        %777 = vmatpush1.msra.mxu0 0.0
        %778 = vmatprep.subr.mxu0 0.0
        %779 = vmatpush1.msra.mxu0 0.0
        %780 = vmatprep.subr.mxu0 0.0
        %781 = vmatpush1.msra.mxu0 0.0
        %782 = vmatprep.subr.mxu0 0.0
        %783 = vmatpush1.msra.mxu0 0.0
        %784 = vmatprep.subr.mxu0 0.0
        %785 = vmatpush1.msra.mxu0 0.0
        %786 = vmatprep.subr.mxu0 0.0
        %787 = vmatpush1.msra.mxu0 0.0
        %788 = vmatprep.subr.mxu0 0.0
        %789 = vmatpush1.msra.mxu0 0.0
        %790 = vmatprep.subr.mxu0 0.0
        %791 = vmatpush1.msra.mxu0 0.0
        %792 = vmatprep.subr.mxu0 0.0
        %793 = vmatpush1.msra.mxu0 0.0
        %794 = vmatprep.subr.mxu0 0.0
        %795 = vmatpush1.msra.mxu0 0.0
        %796 = vmatprep.subr.mxu0 0.0
        %797 = vmatpush1.msra.mxu0 0.0
        %798 = vmatprep.subr.mxu0 0.0
        %799 = vmatpush1.msra.mxu0 0.0
        %800 = vmatprep.subr.mxu0 0.0
        %801 = vmatpush1.msra.mxu0 0.0
        %802 = vmatprep.subr.mxu0 0.0
        %803 = vmatpush1.msra.mxu0 0.0
        %804 = vmatprep.mubr.f32.mxu0 0.0
        %805 = vmatmul.mubr.f32.gmra.mrb[0].mxu0 %v736
        %v806 = vpop.f32.mrb[0].mxu0
        %v807 = vadd.f32 0.0, %v806
        %v808 = vpop.f32.mrb[0].mxu0
        %809 = vdwg.mxu0
        %v810 = vadd.f32 %v724, %v807
        %v811 = vld [vmem:[%s4] sm:$0xf]
        %813 = vset.pattern.permute.xlu0 0
        %814 = vperm.xlu0 %813, %v811
        %v815 = vpop.permute.xlu0 %814
        %v817 = vadd.f32 %v810, %v815
        %818 = vst [vmem:[%s306] sm:$0xf] %v817
        %s819 = sand.u32 %s162, 1
        %s820 = scalar_lea.sflag [#allocation4], %s819
        %s821 = sand.u32 %s162, 1
        %s822 = smul.addr %s821, 4
        %s823 = scalar_lea.vmem [#allocation8], %s822
        // Predicated region
        $region53: #{tpu_custom_call.1} parent=39 // pred_check
          %p824 = pneg %p172
        $region54: #{tpu_custom_call.1} parent=39 // pred_check_branch
          %826 = sbr.rel (%p824) target = $region56
        $region55: #{tpu_custom_call.1} parent=39 // pred_region
          %s828 = ssub.s32 64, 64
          %829 = vsyncadd %s820, %s828
          %s830 = sadd.s32 %s30, %s29
          %s831 = smul.addr %s830, 64
          %s832 = scalar_lea.hbm %s5, %s831
          %s834 = sshll.u32 %s823, 4
          %s835 = int_to_ptr.vmem [resolvable:$true] %s834
          %837 = dma.vmem_to_hbm [thread:$0]  %s835, 64, %s832, %s820
        $region56: #{tpu_custom_call.1} parent=39 // pred_fallthru
          _
      $region40: #{tpu_custom_call.1} parent=5 // pred_fallthru
        _
      %p838 = scmp.le.s32.totalorder 2, %s20
      // Predicated region
      $region57: #{tpu_custom_call.1} parent=5 // pred_check
        %p839 = pneg %p838
      $region58: #{tpu_custom_call.1} parent=5 // pred_check_branch
        %841 = sbr.rel (%p839) target = $region60
      $region59: #{tpu_custom_call.1} parent=5 // pred_region
        %s842 = ssub.s32 %s20, 2
        // Predicated region
        $region61: #{tpu_custom_call.1} parent=59 // pred_check
          %p843 = pneg %p178
        $region62: #{tpu_custom_call.1} parent=59 // pred_check_branch
          %845 = sbr.rel (%p843) target = $region64
        $region63: #{tpu_custom_call.1} parent=59 // pred_region
          %s846 = sand.u32 %s163, 1
          %s847 = scalar_lea.sflag [#allocation4], %s846
          %s848 = sand.u32 %s163, 1
          %s849 = smul.addr %s848, 4
          %s850 = scalar_lea.vmem [#allocation8], %s849
          %851 = dma.done %s847, 64
        $region64: #{tpu_custom_call.1} parent=59 // pred_fallthru
          _
      $region60: #{tpu_custom_call.1} parent=5 // pred_fallthru
        _
    $region6: #{tpu_custom_call.1} parent=1 // loop_footer
      %s24 = sadd.s32 1, %s20
    $region7: #{tpu_custom_call.1} parent=1 // loop_footer_branch
      %19 = sbr.rel target = $region3
    $region8: #{tpu_custom_call.1} parent=1 // loop_exit
      _
    %852 = vsyncpa [#allocation3], 1
    %s853 = scalar_lea.sflag [#allocation3], 1
    %854 = vsyncpa %s853, 1
    %855 = vsyncpa [#allocation6], 1
    %s856 = scalar_lea.sflag [#allocation6], 1
    %857 = vsyncpa %s856, 1
    %858 = vsyncpa [#allocation4], 1
    %s859 = scalar_lea.sflag [#allocation4], 1
    %860 = vsyncpa %s859, 1

</llo_original>
